<compile_context>
chip_gen: v6e
topology: v6e:2x2x1
jax: 0.10.0
libtpu: 0.0.40
codegen_flags: <defaults>
</compile_context>

<pallas_src>
import functools

import jax
import jax.numpy as jnp
from jax.experimental import pallas as pl
from jax.experimental.pallas import tpu as pltpu


# ----------------------------- kernels ------------------------------------ #

def qkv_proj_kernel(x_ref, w_ref, b_ref, q_ref, k_ref, v_ref):
    """Fused Q/K/V projection on a row tile of the flattened [B*L, D] input.

    w_ref: (3, D, D) stacked weights, resident in VMEM across the row grid.
    The activation tile is loaded once and drives all three projections.
    (For D % 128 == 0 one would use a single [D, 3D] dot for better MXU
    N-fill; at D=32 the fill is identical and separate dots keep every store
    lane-aligned.)
    """
    x = x_ref[...]
    q_ref[...] = jnp.dot(x, w_ref[0], preferred_element_type=jnp.float32) + b_ref[0]
    k_ref[...] = jnp.dot(x, w_ref[1], preferred_element_type=jnp.float32) + b_ref[1]
    v_ref[...] = jnp.dot(x, w_ref[2], preferred_element_type=jnp.float32) + b_ref[2]


def attention_kernel(scale, q_ref, k_ref, v_ref, o_ref):
    """Scaled dot-product attention for a block of (batch*head) slices.

    Block shape is (heads_per_step, L, dim_head); all heads in the block are
    processed with batched einsums so tiny per-head matmuls are amortized over
    one grid step.
    """
    q = q_ref[...]                     # (HB, L, dh)
    k = k_ref[...]
    v = v_ref[...]
    s = jnp.einsum("hqd,hkd->hqk", q, k,
                   preferred_element_type=jnp.float32) * scale
    # numerically-stable softmax over the last axis
    s = s - jnp.max(s, axis=-1, keepdims=True)
    p = jnp.exp(s)
    denom = jnp.sum(p, axis=-1, keepdims=True)
    # One reciprocal per row (broadcast multiply) instead of an elementwise
    # divide of the full (HB, L, L) tensor.  approx=True would route it to the
    # EUP slot; kept exact here to preserve the 1e-4 parity check.
    p = p * pl.reciprocal(denom, approx=False)
    o_ref[...] = jnp.einsum("hqk,hkd->hqd", p, v,
                            preferred_element_type=jnp.float32)


def out_proj_ln_kernel(eps, ctx_ref, x_ref, wo_ref, bo_ref, g_ref, b_ref,
                       o_ref):
    """fc(context) + residual + LayerNorm on a row tile (weights resident)."""
    ctx = ctx_ref[...]
    out = jnp.dot(ctx, wo_ref[...],
                  preferred_element_type=jnp.float32) + bo_ref[...]
    # dropout(p=0.0) is the identity.
    out = out + x_ref[...]
    mu = jnp.mean(out, axis=-1, keepdims=True)
    var = jnp.mean(jnp.square(out - mu), axis=-1, keepdims=True)
    normed = (out - mu) * jax.lax.rsqrt(var + eps)
    o_ref[...] = normed * g_ref[...] + b_ref[...]


# ----------------------------- wrapper ------------------------------------ #

def multi_head_attention(x, params, num_head):
    B, L, D = x.shape
    assert D % num_head == 0
    dh = D // num_head
    BL = B * L
    BH = B * num_head

    x2d = x.reshape(BL, D)  # row-major flatten; Linear acts on the last dim

    # ---------------- fused, row-tiled QKV projection ----------------------
    tm = BL if BL <= 256 else 256           # row tile (fits v7x 32MiB scoped VMEM)
    grid_rows = pl.cdiv(BL, tm)
    row_spec = pl.BlockSpec((tm, D), lambda i: (i, 0))
    w_spec = pl.BlockSpec((3, D, D), lambda i: (0, 0, 0))   # resident weights
    bias_spec = pl.BlockSpec((3, 1, D), lambda i: (0, 0, 0))

    q2d, k2d, v2d = pl.pallas_call(
        qkv_proj_kernel,
        out_shape=[jax.ShapeDtypeStruct((BL, D), jnp.float32)] * 3,
        grid=(grid_rows,),
        in_specs=[row_spec, w_spec, bias_spec],
        out_specs=[row_spec] * 3,
        compiler_params=pltpu.CompilerParams(
            dimension_semantics=("parallel",)),
    )(x2d, params["wqkv"], params["bqkv"])

    # --- torch `.view(batch*num_head, -1, dim_head)`: row-major reshape -----
    # (contiguous HBM reshape -> free bitcast; this is NOT a per-feature split)
    qh = q2d.reshape(BH, L, dh)
    kh = k2d.reshape(BH, L, dh)
    vh = v2d.reshape(BH, L, dh)

    # ---------------- attention: many heads per grid step -------------------
    scale = float(dh) ** (-0.5)
    per_head_bytes = 4 * L * (3 * dh + L + dh)          # q,k,v,scores,ctx (f32)
    hb = max(num_head, min(BH, (4 << 20) // max(per_head_bytes, 1)))
    hb = min(hb, BH)
    while BH % hb:                                      # keep an exact divisor
        hb -= 1
    head_spec = pl.BlockSpec((hb, L, dh), lambda g: (g, 0, 0))

    ctx = pl.pallas_call(
        functools.partial(attention_kernel, scale),
        out_shape=jax.ShapeDtypeStruct((BH, L, dh), jnp.float32),
        grid=(BH // hb,),
        in_specs=[head_spec, head_spec, head_spec],
        out_specs=head_spec,
        compiler_params=pltpu.CompilerParams(
            dimension_semantics=("parallel",)),
    )(qh, kh, vh)

    # --- context.view(batch, -1, dim_model): row-major reshape (free) -------
    ctx2d = ctx.reshape(BL, D)

    # ------------- fused output projection + residual + LayerNorm -----------
    vec_spec = pl.BlockSpec((1, D), lambda i: (0, 0))
    out2d = pl.pallas_call(
        functools.partial(out_proj_ln_kernel, 1e-5),
        out_shape=jax.ShapeDtypeStruct((BL, D), jnp.float32),
        grid=(grid_rows,),
        in_specs=[row_spec, row_spec,
                  pl.BlockSpec((D, D), lambda i: (0, 0)),   # resident Wo
                  vec_spec, vec_spec, vec_spec],
        out_specs=row_spec,
        compiler_params=pltpu.CompilerParams(
            dimension_semantics=("parallel",)),
    )(ctx2d, x2d, params["wo"], params["bo"], params["gamma"], params["beta"])

    return out2d.reshape(B, L, D)


# --------------------------- pure-JAX reference ---------------------------- #

def reference(x, params, num_head):
    B, L, D = x.shape
    dh = D // num_head
    wq, wk, wv = params["wqkv"][0], params["wqkv"][1], params["wqkv"][2]
    bq, bk, bv = params["bqkv"][0], params["bqkv"][1], params["bqkv"][2]
    q = x @ wq + bq
    k = x @ wk + bk
    v = x @ wv + bv
    qh = q.reshape(B * num_head, L, dh)
    kh = k.reshape(B * num_head, L, dh)
    vh = v.reshape(B * num_head, L, dh)
    att = jnp.einsum("bqd,bkd->bqk", qh, kh) * (dh ** -0.5)
    att = jax.nn.softmax(att, axis=-1)
    ctx = jnp.einsum("bqk,bkd->bqd", att, vh).reshape(B, L, D)
    out = ctx @ params["wo"] + params["bo"] + x
    mu = out.mean(-1, keepdims=True)
    var = ((out - mu) ** 2).mean(-1, keepdims=True)
    return (out - mu) / jnp.sqrt(var + 1e-5) * params["gamma"] + params["beta"]


# ------------------------------- main -------------------------------------- #

if __name__ == "__main__":
    B, L, D, H = 2, 8, 32, 4  # batch, seq_len, dim_model, num_head

    key = jax.random.PRNGKey(0)
    keys = jax.random.split(key, 10)
    x = jax.random.normal(keys[0], (B, L, D), jnp.float32)

    # Deterministic synthetic parameters (PyTorch-Linear-style uniform init).
    # Weights are stored pre-transposed as [in, out] so kernels compute x@W+b;
    # Q/K/V weights and biases are stacked so the projection kernel keeps them
    # resident in VMEM and reads the activation tile only once.
    bound = 1.0 / (D ** 0.5)
    u = lambda k, s: jax.random.uniform(k, s, jnp.float32, -bound, bound)
    params = {
        "wqkv": jnp.stack([u(keys[1], (D, D)), u(keys[3], (D, D)),
                           u(keys[5], (D, D))]),            # (3, D, D)
        "bqkv": jnp.stack([u(keys[2], (1, D)), u(keys[4], (1, D)),
                           u(keys[6], (1, D))]),            # (3, 1, D)
        "wo": u(keys[7], (D, D)), "bo": u(keys[8], (1, D)),
        "gamma": jnp.ones((1, D), jnp.float32),
        "beta": jnp.zeros((1, D), jnp.float32),
    }

    out = multi_head_attention(x, params, H)
    out = jax.block_until_ready(out)

    ref = reference(x, params, H)
    assert out.shape == (B, L, D)
    assert jnp.allclose(out, ref, atol=1e-4, rtol=1e-4), "mismatch vs reference"

    print("KERNEL_OK")
</pallas_src>

<mosaic_0001>
module attributes {stable_mosaic.version = 11 : i64} {
  func.func @qkv_proj_kernel(%arg0: i32, %arg1: memref<16x32xf32, #tpu.memory_space<vmem>>, %arg2: memref<3x32x32xf32, #tpu.memory_space<vmem>>, %arg3: memref<3x1x32xf32, #tpu.memory_space<vmem>>, %arg4: memref<16x32xf32, #tpu.memory_space<vmem>>, %arg5: memref<16x32xf32, #tpu.memory_space<vmem>>, %arg6: memref<16x32xf32, #tpu.memory_space<vmem>>) attributes {dimension_semantics = [#tpu.dimension_semantics<parallel>], iteration_bounds = array<i64: 1>, scalar_prefetch = 0 : i64, scratch_operands = 0 : i64, tpu.core_type = #tpu.core_type<tc>, window_params = [{transform_indices = @transform_0, window_bounds = array<i64: 16, 32>}, {pipeline_mode = #tpu.pipeline_mode<synchronous>, transform_indices = @transform_1, window_bounds = array<i64: 3, 32, 32>}, {pipeline_mode = #tpu.pipeline_mode<synchronous>, transform_indices = @transform_2, window_bounds = array<i64: 3, 1, 32>}, {transform_indices = @transform_3, window_bounds = array<i64: 16, 32>}, {transform_indices = @transform_4, window_bounds = array<i64: 16, 32>}, {transform_indices = @transform_5, window_bounds = array<i64: 16, 32>}]} {
    %c0 = arith.constant 0 : index
    %c0_0 = arith.constant 0 : index
    %0 = vector.load %arg1[%c0, %c0_0] : memref<16x32xf32, #tpu.memory_space<vmem>>, vector<16x32xf32>
    %c0_1 = arith.constant 0 : index
    %c0_2 = arith.constant 0 : index
    %c0_3 = arith.constant 0 : index
    %1 = vector.load %arg2[%c0_1, %c0_2, %c0_3] : memref<3x32x32xf32, #tpu.memory_space<vmem>>, vector<1x32x32xf32>
    %2 = vector.shape_cast %1 : vector<1x32x32xf32> to vector<32x32xf32>
    %cst = arith.constant dense<0.000000e+00> : vector<16x32xf32>
    %3 = tpu.matmul %0, %2, %cst {dimension_numbers = #tpu.dot_dimension_numbers<[1], [0], [0], [1], [0, 0, 1, 1], [], []>} : vector<16x32xf32>, vector<32x32xf32>, vector<16x32xf32> -> vector<16x32xf32>
    %c0_4 = arith.constant 0 : index
    %c0_5 = arith.constant 0 : index
    %c0_6 = arith.constant 0 : index
    %4 = vector.load %arg3[%c0_4, %c0_5, %c0_6] : memref<3x1x32xf32, #tpu.memory_space<vmem>>, vector<1x1x32xf32>
    %5 = vector.shape_cast %4 : vector<1x1x32xf32> to vector<1x32xf32>
    %6 = vector.broadcast %5 : vector<1x32xf32> to vector<16x32xf32>
    %7 = arith.addf %3, %6 : vector<16x32xf32>
    %c0_7 = arith.constant 0 : index
    %c0_8 = arith.constant 0 : index
    %8 = vector.load %arg4[%c0_7, %c0_8] : memref<16x32xf32, #tpu.memory_space<vmem>>, vector<16x32xf32>
    tpu.vector_store %arg4[%c0_7, %c0_8], %7 {strides = array<i32>} : memref<16x32xf32, #tpu.memory_space<vmem>>, vector<16x32xf32>,
    %c1 = arith.constant 1 : index
    %c0_9 = arith.constant 0 : index
    %c0_10 = arith.constant 0 : index
    %9 = vector.load %arg2[%c1, %c0_9, %c0_10] : memref<3x32x32xf32, #tpu.memory_space<vmem>>, vector<1x32x32xf32>
    %10 = vector.shape_cast %9 : vector<1x32x32xf32> to vector<32x32xf32>
    %cst_11 = arith.constant dense<0.000000e+00> : vector<16x32xf32>
    %11 = tpu.matmul %0, %10, %cst_11 {dimension_numbers = #tpu.dot_dimension_numbers<[1], [0], [0], [1], [0, 0, 1, 1], [], []>} : vector<16x32xf32>, vector<32x32xf32>, vector<16x32xf32> -> vector<16x32xf32>
    %c1_12 = arith.constant 1 : index
    %c0_13 = arith.constant 0 : index
    %c0_14 = arith.constant 0 : index
    %12 = vector.load %arg3[%c1_12, %c0_13, %c0_14] : memref<3x1x32xf32, #tpu.memory_space<vmem>>, vector<1x1x32xf32>
    %13 = vector.shape_cast %12 : vector<1x1x32xf32> to vector<1x32xf32>
    %14 = vector.broadcast %13 : vector<1x32xf32> to vector<16x32xf32>
    %15 = arith.addf %11, %14 : vector<16x32xf32>
    %c0_15 = arith.constant 0 : index
    %c0_16 = arith.constant 0 : index
    %16 = vector.load %arg5[%c0_15, %c0_16] : memref<16x32xf32, #tpu.memory_space<vmem>>, vector<16x32xf32>
    tpu.vector_store %arg5[%c0_15, %c0_16], %15 {strides = array<i32>} : memref<16x32xf32, #tpu.memory_space<vmem>>, vector<16x32xf32>,
    %c2 = arith.constant 2 : index
    %c0_17 = arith.constant 0 : index
    %c0_18 = arith.constant 0 : index
    %17 = vector.load %arg2[%c2, %c0_17, %c0_18] : memref<3x32x32xf32, #tpu.memory_space<vmem>>, vector<1x32x32xf32>
    %18 = vector.shape_cast %17 : vector<1x32x32xf32> to vector<32x32xf32>
    %cst_19 = arith.constant dense<0.000000e+00> : vector<16x32xf32>
    %19 = tpu.matmul %0, %18, %cst_19 {dimension_numbers = #tpu.dot_dimension_numbers<[1], [0], [0], [1], [0, 0, 1, 1], [], []>} : vector<16x32xf32>, vector<32x32xf32>, vector<16x32xf32> -> vector<16x32xf32>
    %c2_20 = arith.constant 2 : index
    %c0_21 = arith.constant 0 : index
    %c0_22 = arith.constant 0 : index
    %20 = vector.load %arg3[%c2_20, %c0_21, %c0_22] : memref<3x1x32xf32, #tpu.memory_space<vmem>>, vector<1x1x32xf32>
    %21 = vector.shape_cast %20 : vector<1x1x32xf32> to vector<1x32xf32>
    %22 = vector.broadcast %21 : vector<1x32xf32> to vector<16x32xf32>
    %23 = arith.addf %19, %22 : vector<16x32xf32>
    %c0_23 = arith.constant 0 : index
    %c0_24 = arith.constant 0 : index
    %24 = vector.load %arg6[%c0_23, %c0_24] : memref<16x32xf32, #tpu.memory_space<vmem>>, vector<16x32xf32>
    tpu.vector_store %arg6[%c0_23, %c0_24], %23 {strides = array<i32>} : memref<16x32xf32, #tpu.memory_space<vmem>>, vector<16x32xf32>,
    return
  }
  func.func @transform_0(%arg0: i32) -> (i32, i32) {
    %c0_i32 = arith.constant 0 : i32
    %c0_i32_0 = arith.constant 0 : i32
    return %arg0, %c0_i32 : i32, i32
  }
  func.func @transform_1(%arg0: i32) -> (i32, i32, i32) {
    %c0_i32 = arith.constant 0 : i32
    %c0_i32_0 = arith.constant 0 : i32
    %c0_i32_1 = arith.constant 0 : i32
    %c0_i32_2 = arith.constant 0 : i32
    return %c0_i32, %c0_i32_0, %c0_i32_1 : i32, i32, i32
  }
  func.func @transform_2(%arg0: i32) -> (i32, i32, i32) {
    %c0_i32 = arith.constant 0 : i32
    %c0_i32_0 = arith.constant 0 : i32
    %c0_i32_1 = arith.constant 0 : i32
    %c0_i32_2 = arith.constant 0 : i32
    return %c0_i32, %c0_i32_0, %c0_i32_1 : i32, i32, i32
  }
  func.func @transform_3(%arg0: i32) -> (i32, i32) {
    %c0_i32 = arith.constant 0 : i32
    %c0_i32_0 = arith.constant 0 : i32
    return %arg0, %c0_i32 : i32, i32
  }
  func.func @transform_4(%arg0: i32) -> (i32, i32) {
    %c0_i32 = arith.constant 0 : i32
    %c0_i32_0 = arith.constant 0 : i32
    return %arg0, %c0_i32 : i32, i32
  }
  func.func @transform_5(%arg0: i32) -> (i32, i32) {
    %c0_i32 = arith.constant 0 : i32
    %c0_i32_0 = arith.constant 0 : i32
    return %arg0, %c0_i32 : i32, i32
  }
}

</mosaic_0001>

<llo_original>
// kernel: tpu_custom_call.1
$region0: #{tpu_custom_call.1}
  #allocation0 [shape = 'u32[]', space=smem, size = 0x4, offset = 0x4, fixed_abs, tag = 'smem constant byte address 0x4 - core index']
  #allocation1 [shape = 'u32[144,128]{1,0:T(1,128)}', space=vmem, size = 0x12000, scoped, tag = 'internal scratch']
  %s0 = inlined_call_operand.hbm [shape: f32[16,32], index: 0, kind: input, shape index: {}]
  %s1 = inlined_call_operand.hbm [shape: f32[3,32,32], index: 1, kind: input, shape index: {}]
  %s2 = inlined_call_operand.vmem [shape: f32[3,1,32], index: 2, kind: input, shape index: {}]
  %s3 = inlined_call_operand.hbm [shape: f32[16,32], index: 3, kind: output, shape index: {0}]
  %s4 = inlined_call_operand.hbm [shape: f32[16,32], index: 4, kind: output, shape index: {1}]
  %s5 = inlined_call_operand.hbm [shape: f32[16,32], index: 5, kind: output, shape index: {2}]
  %6 = xla_tuple %s3, %s4, %s5
  %s7 = sld [smem:[#allocation0]]
  $region46: #{tpu_custom_call.1} parent=0
    _
  %s9 = ssub.s32 1, %s7
  %s10 = scalar_select 0, %s9, %s7
  $region1: #{tpu_custom_call.1} parent=0
    #allocation2 [shape = 'u8[8192]{0}', space=vmem, size = 0x2000, scoped, tag = 'input window, operand 0, single buffered']
    #allocation3 [shape = 's32[1]{0}', space=sflag, size = 0x4, scoped, tag = 'scoped memory for tpu_custom_call.1']
    #allocation4 [shape = 's32[1]{0}', space=sflag, size = 0x4, scoped, tag = 'scoped memory for tpu_custom_call.1']
    #allocation5 [shape = 'u8[49152]{0}', space=vmem, size = 0xc000, scoped, tag = 'input window, operand 1, single buffered']
    #allocation6 [shape = 's32[1]{0}', space=sflag, size = 0x4, scoped, tag = 'scoped memory for tpu_custom_call.1']
    #allocation7 [shape = 'u8[8192]{0}', space=vmem, size = 0x2000, scoped, tag = 'output window, operand 0, single buffered']
    #allocation8 [shape = 'u8[8192]{0}', space=vmem, size = 0x2000, scoped, tag = 'output window, operand 1, single buffered']
    #allocation9 [shape = 's32[1]{0}', space=sflag, size = 0x4, scoped, tag = 'scoped memory for tpu_custom_call.1']
    #allocation10 [shape = 'u8[8192]{0}', space=vmem, size = 0x2000, scoped, tag = 'output window, operand 2, single buffered']
    %11 = vsyncpa [#allocation3], 0
    %12 = vsyncpa [#allocation6], 0
    %13 = vsyncpa [#allocation4], 0
    %14 = vsyncpa [#allocation9], 0
    // Predicated region
    $region2: #{tpu_custom_call.1} parent=1 // pred_check
      _
    $region3: #{tpu_custom_call.1} parent=1 // pred_check_branch
      %16 = sbr.rel (0) target = $region5
    $region4: #{tpu_custom_call.1} parent=1 // pred_region
      %s18 = ssub.s32 256, 256
      %19 = vsyncadd [#allocation3], %s18
      %s20 = sshll.u32 [#allocation2], 4
      %s21 = int_to_ptr.vmem [resolvable:$true] %s20
      %26 = dma.hbm_to_vmem [thread:$0]  %s0, 256, %s21, [#allocation3], 128, 128, 8
    $region5: #{tpu_custom_call.1} parent=1 // pred_fallthru
      _
    // Predicated region
    $region6: #{tpu_custom_call.1} parent=1 // pred_check
      _
    $region7: #{tpu_custom_call.1} parent=1 // pred_check_branch
      %28 = sbr.rel (0) target = $region9
    $region8: #{tpu_custom_call.1} parent=1 // pred_region
      %s30 = ssub.s32 1536, 1536
      %31 = vsyncadd [#allocation6], %s30
      %s32 = sshll.u32 [#allocation5], 4
      %s33 = int_to_ptr.vmem [resolvable:$true] %s32
      %38 = dma.hbm_to_vmem [thread:$0]  %s1, 1536, %s33, [#allocation6], 128, 128, 8
    $region9: #{tpu_custom_call.1} parent=1 // pred_fallthru
      _
    // Predicated region
    $region10: #{tpu_custom_call.1} parent=1 // pred_check
      _
    $region11: #{tpu_custom_call.1} parent=1 // pred_check_branch
      %40 = sbr.rel (0) target = $region13
    $region12: #{tpu_custom_call.1} parent=1 // pred_region
      _
    $region13: #{tpu_custom_call.1} parent=1 // pred_fallthru
      _
    // Predicated region
    $region14: #{tpu_custom_call.1} parent=1 // pred_check
      _
    $region15: #{tpu_custom_call.1} parent=1 // pred_check_branch
      %42 = sbr.rel (0) target = $region17
    $region16: #{tpu_custom_call.1} parent=1 // pred_region
      %43 = dma.done [#allocation3], 256
    $region17: #{tpu_custom_call.1} parent=1 // pred_fallthru
      _
    // Predicated region
    $region18: #{tpu_custom_call.1} parent=1 // pred_check
      _
    $region19: #{tpu_custom_call.1} parent=1 // pred_check_branch
      %45 = sbr.rel (0) target = $region21
    $region20: #{tpu_custom_call.1} parent=1 // pred_region
      %46 = dma.done [#allocation6], 1536
    $region21: #{tpu_custom_call.1} parent=1 // pred_fallthru
      _
    %v47 = vld [vmem:[#allocation2] sm:$0xff]
    %v48 = vld [vmem:[#allocation2 + $0x8] sm:$0xff]
    %v49 = vld [vmem:[#allocation5] sm:$0xff]
    %v50 = vld [vmem:[#allocation5 + $0x8] sm:$0xff]
    %v51 = vld [vmem:[#allocation5 + $0x10] sm:$0xff]
    %v52 = vld [vmem:[#allocation5 + $0x18] sm:$0xff]
    %v53 = vld [vmem:[%s2] sm:$0x1]
    %v55 = vlaneseq
    %v56 = vshrl.u32 %v55, 7
    %v57 = vsub.s32 0, %v56
    %v58 = vrot.slane %v53, %v57
    %vm60 = vcmask 261120
    %v62 = vsel %vm60, %v47, 0
    %v65 = vsel %vm60, %v48, 0
    %67 = vmatprep.subr.mxu0 0.0
    %68 = vmatpush1.msra.mxu0 0.0
    %69 = vmatprep.subr.mxu0 0.0
    %70 = vmatpush1.msra.mxu0 0.0
    %71 = vmatprep.subr.mxu0 0.0
    %72 = vmatpush1.msra.mxu0 0.0
    %73 = vmatprep.subr.mxu0 0.0
    %74 = vmatpush1.msra.mxu0 0.0
    %75 = vmatprep.subr.mxu0 0.0
    %76 = vmatpush1.msra.mxu0 0.0
    %77 = vmatprep.subr.mxu0 0.0
    %78 = vmatpush1.msra.mxu0 0.0
    %79 = vmatprep.subr.mxu0 0.0
    %80 = vmatpush1.msra.mxu0 0.0
    %81 = vmatprep.subr.mxu0 0.0
    %82 = vmatpush1.msra.mxu0 0.0
    %83 = vmatprep.subr.mxu0 0.0
    %84 = vmatpush1.msra.mxu0 0.0
    %85 = vmatprep.subr.mxu0 0.0
    %86 = vmatpush1.msra.mxu0 0.0
    %87 = vmatprep.subr.mxu0 0.0
    %88 = vmatpush1.msra.mxu0 0.0
    %89 = vmatprep.subr.mxu0 0.0
    %90 = vmatpush1.msra.mxu0 0.0
    %91 = vmatprep.subr.mxu0 0.0
    %92 = vmatpush1.msra.mxu0 %v52
    %93 = vmatprep.subr.mxu0 0.0
    %94 = vmatpush1.msra.mxu0 %v51
    %95 = vmatprep.subr.mxu0 0.0
    %96 = vmatpush1.msra.mxu0 %v50
    %97 = vmatprep.subr.mxu0 0.0
    %98 = vmatpush1.msra.mxu0 %v49
    %99 = vmatprep.subr.mxu0 0.0
    %100 = vmatpush2.msra.mxu0 0.0
    %101 = vmatprep.subr.mxu0 0.0
    %102 = vmatpush2.msra.mxu0 0.0
    %103 = vmatprep.subr.mxu0 0.0
    %104 = vmatpush2.msra.mxu0 0.0
    %105 = vmatprep.subr.mxu0 0.0
    %106 = vmatpush2.msra.mxu0 0.0
    %107 = vmatprep.subr.mxu0 0.0
    %108 = vmatpush2.msra.mxu0 0.0
    %109 = vmatprep.subr.mxu0 0.0
    %110 = vmatpush2.msra.mxu0 0.0
    %111 = vmatprep.subr.mxu0 0.0
    %112 = vmatpush2.msra.mxu0 0.0
    %113 = vmatprep.subr.mxu0 0.0
    %114 = vmatpush2.msra.mxu0 0.0
    %115 = vmatprep.subr.mxu0 0.0
    %116 = vmatpush2.msra.mxu0 0.0
    %117 = vmatprep.subr.mxu0 0.0
    %118 = vmatpush2.msra.mxu0 0.0
    %119 = vmatprep.subr.mxu0 0.0
    %120 = vmatpush2.msra.mxu0 0.0
    %121 = vmatprep.subr.mxu0 0.0
    %122 = vmatpush2.msra.mxu0 0.0
    %123 = vmatprep.subr.mxu0 0.0
    %124 = vmatpush2.msra.mxu0 0.0
    %125 = vmatprep.subr.mxu0 0.0
    %126 = vmatpush2.msra.mxu0 0.0
    %127 = vmatprep.subr.mxu0 0.0
    %128 = vmatpush2.msra.mxu0 0.0
    %129 = vmatprep.subr.mxu0 0.0
    %130 = vmatpush2.msra.mxu0 0.0
    %131 = vmatprep.mubr.f32.mxu0 0.0
    %132 = vmatmul.mubr.f32.gmra.mxu0 %v62
    %v133 = vpop.f32.mrf.mxu0
    %v134 = vadd.f32 %v58, %v133
    %v135 = vpop.f32.mrf.mxu0
    %136 = vmatprep.mubr.f32.mxu0 0.0
    %137 = vmatmul.mubr.f32.gmra.mxu0 %v65
    %v138 = vpop.f32.mrf.mxu0
    %v139 = vadd.f32 %v58, %v138
    %v140 = vpop.f32.mrf.mxu0
    %141 = vdwg.mxu0
    %142 = vst.msk [vmem:[#allocation7] sm:$0xff] %vm60, %v134
    %143 = vst.msk [vmem:[#allocation7 + $0x8] sm:$0xff] %vm60, %v139
    %s144 = scalar_lea.vmem [#allocation5], 32
    %v145 = vld [vmem:[%s144] sm:$0xff]
    %v146 = vld [vmem:[%s144 + $0x8] sm:$0xff]
    %v147 = vld [vmem:[%s144 + $0x10] sm:$0xff]
    %v148 = vld [vmem:[%s144 + $0x18] sm:$0xff]
    %s149 = scalar_lea.vmem %s2, 1
    %v150 = vld [vmem:[%s149] sm:$0x1]
    %v152 = vlaneseq
    %v153 = vshrl.u32 %v152, 7
    %v154 = vsub.s32 0, %v153
    %v155 = vrot.slane %v150, %v154
    %157 = vmatprep.subr.mxu0 0.0
    %158 = vmatpush1.msra.mxu0 0.0
    %159 = vmatprep.subr.mxu0 0.0
    %160 = vmatpush1.msra.mxu0 0.0
    %161 = vmatprep.subr.mxu0 0.0
    %162 = vmatpush1.msra.mxu0 0.0
    %163 = vmatprep.subr.mxu0 0.0
    %164 = vmatpush1.msra.mxu0 0.0
    %165 = vmatprep.subr.mxu0 0.0
    %166 = vmatpush1.msra.mxu0 0.0
    %167 = vmatprep.subr.mxu0 0.0
    %168 = vmatpush1.msra.mxu0 0.0
    %169 = vmatprep.subr.mxu0 0.0
    %170 = vmatpush1.msra.mxu0 0.0
    %171 = vmatprep.subr.mxu0 0.0
    %172 = vmatpush1.msra.mxu0 0.0
    %173 = vmatprep.subr.mxu0 0.0
    %174 = vmatpush1.msra.mxu0 0.0
    %175 = vmatprep.subr.mxu0 0.0
    %176 = vmatpush1.msra.mxu0 0.0
    %177 = vmatprep.subr.mxu0 0.0
    %178 = vmatpush1.msra.mxu0 0.0
    %179 = vmatprep.subr.mxu0 0.0
    %180 = vmatpush1.msra.mxu0 0.0
    %181 = vmatprep.subr.mxu0 0.0
    %182 = vmatpush1.msra.mxu0 %v148
    %183 = vmatprep.subr.mxu0 0.0
    %184 = vmatpush1.msra.mxu0 %v147
    %185 = vmatprep.subr.mxu0 0.0
    %186 = vmatpush1.msra.mxu0 %v146
    %187 = vmatprep.subr.mxu0 0.0
    %188 = vmatpush1.msra.mxu0 %v145
    %189 = vmatprep.subr.mxu0 0.0
    %190 = vmatpush2.msra.mxu0 0.0
    %191 = vmatprep.subr.mxu0 0.0
    %192 = vmatpush2.msra.mxu0 0.0
    %193 = vmatprep.subr.mxu0 0.0
    %194 = vmatpush2.msra.mxu0 0.0
    %195 = vmatprep.subr.mxu0 0.0
    %196 = vmatpush2.msra.mxu0 0.0
    %197 = vmatprep.subr.mxu0 0.0
    %198 = vmatpush2.msra.mxu0 0.0
    %199 = vmatprep.subr.mxu0 0.0
    %200 = vmatpush2.msra.mxu0 0.0
    %201 = vmatprep.subr.mxu0 0.0
    %202 = vmatpush2.msra.mxu0 0.0
    %203 = vmatprep.subr.mxu0 0.0
    %204 = vmatpush2.msra.mxu0 0.0
    %205 = vmatprep.subr.mxu0 0.0
    %206 = vmatpush2.msra.mxu0 0.0
    %207 = vmatprep.subr.mxu0 0.0
    %208 = vmatpush2.msra.mxu0 0.0
    %209 = vmatprep.subr.mxu0 0.0
    %210 = vmatpush2.msra.mxu0 0.0
    %211 = vmatprep.subr.mxu0 0.0
    %212 = vmatpush2.msra.mxu0 0.0
    %213 = vmatprep.subr.mxu0 0.0
    %214 = vmatpush2.msra.mxu0 0.0
    %215 = vmatprep.subr.mxu0 0.0
    %216 = vmatpush2.msra.mxu0 0.0
    %217 = vmatprep.subr.mxu0 0.0
    %218 = vmatpush2.msra.mxu0 0.0
    %219 = vmatprep.subr.mxu0 0.0
    %220 = vmatpush2.msra.mxu0 0.0
    %221 = vmatprep.mubr.f32.mxu0 0.0
    %222 = vmatmul.mubr.f32.gmra.mxu0 %v62
    %v223 = vpop.f32.mrf.mxu0
    %v224 = vadd.f32 %v155, %v223
    %v225 = vpop.f32.mrf.mxu0
    %226 = vmatprep.mubr.f32.mxu0 0.0
    %227 = vmatmul.mubr.f32.gmra.mxu0 %v65
    %v228 = vpop.f32.mrf.mxu0
    %v229 = vadd.f32 %v155, %v228
    %v230 = vpop.f32.mrf.mxu0
    %231 = vdwg.mxu0
    %232 = vst.msk [vmem:[#allocation8] sm:$0xff] %vm60, %v224
    %233 = vst.msk [vmem:[#allocation8 + $0x8] sm:$0xff] %vm60, %v229
    %s234 = scalar_lea.vmem [#allocation5], 64
    %v235 = vld [vmem:[%s234] sm:$0xff]
    %v236 = vld [vmem:[%s234 + $0x8] sm:$0xff]
    %v237 = vld [vmem:[%s234 + $0x10] sm:$0xff]
    %v238 = vld [vmem:[%s234 + $0x18] sm:$0xff]
    %s239 = scalar_lea.vmem %s2, 2
    %v240 = vld [vmem:[%s239] sm:$0x1]
    %v242 = vlaneseq
    %v243 = vshrl.u32 %v242, 7
    %v244 = vsub.s32 0, %v243
    %v245 = vrot.slane %v240, %v244
    %247 = vmatprep.subr.mxu0 0.0
    %248 = vmatpush1.msra.mxu0 0.0
    %249 = vmatprep.subr.mxu0 0.0
    %250 = vmatpush1.msra.mxu0 0.0
    %251 = vmatprep.subr.mxu0 0.0
    %252 = vmatpush1.msra.mxu0 0.0
    %253 = vmatprep.subr.mxu0 0.0
    %254 = vmatpush1.msra.mxu0 0.0
    %255 = vmatprep.subr.mxu0 0.0
    %256 = vmatpush1.msra.mxu0 0.0
    %257 = vmatprep.subr.mxu0 0.0
    %258 = vmatpush1.msra.mxu0 0.0
    %259 = vmatprep.subr.mxu0 0.0
    %260 = vmatpush1.msra.mxu0 0.0
    %261 = vmatprep.subr.mxu0 0.0
    %262 = vmatpush1.msra.mxu0 0.0
    %263 = vmatprep.subr.mxu0 0.0
    %264 = vmatpush1.msra.mxu0 0.0
    %265 = vmatprep.subr.mxu0 0.0
    %266 = vmatpush1.msra.mxu0 0.0
    %267 = vmatprep.subr.mxu0 0.0
    %268 = vmatpush1.msra.mxu0 0.0
    %269 = vmatprep.subr.mxu0 0.0
    %270 = vmatpush1.msra.mxu0 0.0
    %271 = vmatprep.subr.mxu0 0.0
    %272 = vmatpush1.msra.mxu0 %v238
    %273 = vmatprep.subr.mxu0 0.0
    %274 = vmatpush1.msra.mxu0 %v237
    %275 = vmatprep.subr.mxu0 0.0
    %276 = vmatpush1.msra.mxu0 %v236
    %277 = vmatprep.subr.mxu0 0.0
    %278 = vmatpush1.msra.mxu0 %v235
    %279 = vmatprep.subr.mxu0 0.0
    %280 = vmatpush2.msra.mxu0 0.0
    %281 = vmatprep.subr.mxu0 0.0
    %282 = vmatpush2.msra.mxu0 0.0
    %283 = vmatprep.subr.mxu0 0.0
    %284 = vmatpush2.msra.mxu0 0.0
    %285 = vmatprep.subr.mxu0 0.0
    %286 = vmatpush2.msra.mxu0 0.0
    %287 = vmatprep.subr.mxu0 0.0
    %288 = vmatpush2.msra.mxu0 0.0
    %289 = vmatprep.subr.mxu0 0.0
    %290 = vmatpush2.msra.mxu0 0.0
    %291 = vmatprep.subr.mxu0 0.0
    %292 = vmatpush2.msra.mxu0 0.0
    %293 = vmatprep.subr.mxu0 0.0
    %294 = vmatpush2.msra.mxu0 0.0
    %295 = vmatprep.subr.mxu0 0.0
    %296 = vmatpush2.msra.mxu0 0.0
    %297 = vmatprep.subr.mxu0 0.0
    %298 = vmatpush2.msra.mxu0 0.0
    %299 = vmatprep.subr.mxu0 0.0
    %300 = vmatpush2.msra.mxu0 0.0
    %301 = vmatprep.subr.mxu0 0.0
    %302 = vmatpush2.msra.mxu0 0.0
    %303 = vmatprep.subr.mxu0 0.0
    %304 = vmatpush2.msra.mxu0 0.0
    %305 = vmatprep.subr.mxu0 0.0
    %306 = vmatpush2.msra.mxu0 0.0
    %307 = vmatprep.subr.mxu0 0.0
    %308 = vmatpush2.msra.mxu0 0.0
    %309 = vmatprep.subr.mxu0 0.0
    %310 = vmatpush2.msra.mxu0 0.0
    %311 = vmatprep.mubr.f32.mxu0 0.0
    %312 = vmatmul.mubr.f32.gmra.mxu0 %v62
    %v313 = vpop.f32.mrf.mxu0
    %v314 = vadd.f32 %v245, %v313
    %v315 = vpop.f32.mrf.mxu0
    %316 = vmatprep.mubr.f32.mxu0 0.0
    %317 = vmatmul.mubr.f32.gmra.mxu0 %v65
    %v318 = vpop.f32.mrf.mxu0
    %v319 = vadd.f32 %v245, %v318
    %v320 = vpop.f32.mrf.mxu0
    %321 = vdwg.mxu0
    %322 = vst.msk [vmem:[#allocation10] sm:$0xff] %vm60, %v314
    %323 = vst.msk [vmem:[#allocation10 + $0x8] sm:$0xff] %vm60, %v319
    // Predicated region
    $region22: #{tpu_custom_call.1} parent=1 // pred_check
      _
    $region23: #{tpu_custom_call.1} parent=1 // pred_check_branch
      %325 = sbr.rel (0) target = $region25
    $region24: #{tpu_custom_call.1} parent=1 // pred_region
      %s327 = ssub.s32 256, 256
      %328 = vsyncadd [#allocation4], %s327
      %s329 = sshll.u32 [#allocation7], 4
      %s330 = int_to_ptr.vmem [resolvable:$true] %s329
      %335 = dma.vmem_to_hbm [thread:$0]  %s330, 256, %s3, [#allocation4], 128, 128, 8
    $region25: #{tpu_custom_call.1} parent=1 // pred_fallthru
      _
    // Predicated region
    $region26: #{tpu_custom_call.1} parent=1 // pred_check
      _
    $region27: #{tpu_custom_call.1} parent=1 // pred_check_branch
      %337 = sbr.rel (0) target = $region29
    $region28: #{tpu_custom_call.1} parent=1 // pred_region
      %s339 = ssub.s32 256, 256
      %340 = vsyncadd [#allocation9], %s339
      %s341 = sshll.u32 [#allocation8], 4
      %s342 = int_to_ptr.vmem [resolvable:$true] %s341
      %347 = dma.vmem_to_hbm [thread:$0]  %s342, 256, %s4, [#allocation9], 128, 128, 8
    $region29: #{tpu_custom_call.1} parent=1 // pred_fallthru
      _
    // Predicated region
    $region30: #{tpu_custom_call.1} parent=1 // pred_check
      _
    $region31: #{tpu_custom_call.1} parent=1 // pred_check_branch
      %349 = sbr.rel (0) target = $region33
    $region32: #{tpu_custom_call.1} parent=1 // pred_region
      %s351 = ssub.s32 256, 256
      %352 = vsyncadd [#allocation9], %s351
      %s353 = sshll.u32 [#allocation10], 4
      %s354 = int_to_ptr.vmem [resolvable:$true] %s353
      %359 = dma.vmem_to_hbm [thread:$0]  %s354, 256, %s5, [#allocation9], 128, 128, 8
    $region33: #{tpu_custom_call.1} parent=1 // pred_fallthru
      _
    // Predicated region
    $region34: #{tpu_custom_call.1} parent=1 // pred_check
      _
    $region35: #{tpu_custom_call.1} parent=1 // pred_check_branch
      %361 = sbr.rel (0) target = $region37
    $region36: #{tpu_custom_call.1} parent=1 // pred_region
      %362 = dma.done [#allocation4], 256
    $region37: #{tpu_custom_call.1} parent=1 // pred_fallthru
      _
    // Predicated region
    $region38: #{tpu_custom_call.1} parent=1 // pred_check
      _
    $region39: #{tpu_custom_call.1} parent=1 // pred_check_branch
      %364 = sbr.rel (0) target = $region41
    $region40: #{tpu_custom_call.1} parent=1 // pred_region
      %365 = dma.done [#allocation9], 256
    $region41: #{tpu_custom_call.1} parent=1 // pred_fallthru
      _
    // Predicated region
    $region42: #{tpu_custom_call.1} parent=1 // pred_check
      _
    $region43: #{tpu_custom_call.1} parent=1 // pred_check_branch
      %367 = sbr.rel (0) target = $region45
    $region44: #{tpu_custom_call.1} parent=1 // pred_region
      %368 = dma.done [#allocation9], 256
    $region45: #{tpu_custom_call.1} parent=1 // pred_fallthru
      _
    %369 = vsyncpa [#allocation3], 1
    %370 = vsyncpa [#allocation6], 1
    %371 = vsyncpa [#allocation4], 1
    %372 = vsyncpa [#allocation9], 1

</llo_original>
